<compile_context>
chip_gen: v7x
topology: tpu7x:2x2x1
jax: 0.10.0
libtpu: 0.0.40
codegen_flags: <defaults>
</compile_context>

<pallas_src>
import functools

import jax
import jax.numpy as jnp
from jax.experimental import pallas as pl
from jax.experimental.pallas import tpu as pltpu

_NEG_BIG = -1e30  # finite "minus infinity" for masking padded softmax lanes


def _round_up(n: int, m: int) -> int:
    return ((n + m - 1) // m) * m


def _pad2d(a, rows: int, cols: int):
    return jnp.pad(a, ((0, rows - a.shape[0]), (0, cols - a.shape[1])))


def _policy_mlp_kernel(x_ref, w1_ref, b1_ref, w2_ref, b2_ref, w3_ref, b3_ref,
                       o_ref, *, softmax: bool, valid_out: int):
    mm_dtype = w1_ref.dtype
    # Cast the activation tile in-kernel (no padded low-precision copy of x is
    # ever written to HBM by the wrapper).
    x = x_ref[...].astype(mm_dtype)

    # fc1 + ReLU  (MXU matmul, f32 accumulation; elementwise stays f32)
    h = jnp.dot(x, w1_ref[...], preferred_element_type=jnp.float32) + b1_ref[...]
    h = jnp.maximum(h, 0.0)

    # fc2 + ReLU
    h = jnp.dot(h.astype(mm_dtype), w2_ref[...],
                preferred_element_type=jnp.float32) + b2_ref[...]
    h = jnp.maximum(h, 0.0)

    # fc3
    out = jnp.dot(h.astype(mm_dtype), w3_ref[...],
                  preferred_element_type=jnp.float32) + b3_ref[...]

    if softmax:
        if out.shape[-1] > valid_out:
            # Only mask when output lanes are actually padded.
            col = jax.lax.broadcasted_iota(jnp.int32, out.shape, 1)
            out = jnp.where(col < valid_out, out, _NEG_BIG)
        # Numerically stable softmax; EXACT divide so rows sum to 1 (the
        # probabilities may feed Categorical sampling / log-prob terms).
        out = out - jnp.max(out, axis=-1, keepdims=True)
        e = jnp.exp(out)
        out = e / jnp.sum(e, axis=-1, keepdims=True)

    o_ref[...] = out.astype(o_ref.dtype)


def make_policy_mlp(params, *, softmax: bool, compute_dtype=jnp.bfloat16,
                    block_batch: int = 512, out_dtype=jnp.float32):
    """Pad/cast the parameters once and return a jitted fused forward fn."""
    w1, b1, w2, b2, w3, b3 = params
    input_size, hidden_size = w1.shape
    output_size = w3.shape[1]

    # Lane-dense padded feature dims (multiples of 128).
    in_p = _round_up(input_size, 128)
    hid_p = _round_up(hidden_size, 128)
    out_p = _round_up(output_size, 128)

    # --- one-time parameter padding / casting (NOT per forward call) -------
    # Zero weight/bias padding keeps padded hidden lanes at exactly 0 through
    # ReLU, so nothing leaks into later layers.
    w1p = _pad2d(w1, in_p, hid_p).astype(compute_dtype)
    w2p = _pad2d(w2, hid_p, hid_p).astype(compute_dtype)
    w3p = _pad2d(w3, hid_p, out_p).astype(compute_dtype)
    b1p = _pad2d(b1.reshape(1, -1), 1, hid_p).astype(jnp.float32)
    b2p = _pad2d(b2.reshape(1, -1), 1, hid_p).astype(jnp.float32)
    b3p = _pad2d(b3.reshape(1, -1), 1, out_p).astype(jnp.float32)

    itemsize = jnp.dtype(compute_dtype).itemsize
    # Packed sublane count per vreg: f32 -> 8, bf16 -> 16, fp8/int8 -> 32.
    sublane = {4: 8, 2: 16, 1: 32}[itemsize]

    kernel = functools.partial(_policy_mlp_kernel, softmax=softmax,
                               valid_out=output_size)

    def resident(shape):
        # Constant index_map => value stays in VMEM across grid steps; a
        # single buffer is enough (default double-buffering would waste VMEM).
        return pl.BlockSpec(shape, lambda i: (0, 0),
                            pipeline_mode=pl.Buffered(1))

    weight_bytes = ((w1p.size + w2p.size + w3p.size) * itemsize
                    + (b1p.size + b2p.size + b3p.size) * 4)
    out_itemsize = jnp.dtype(out_dtype).itemsize

    def build_call(batch: int):
        tb = min(_round_up(batch, sublane), _round_up(block_batch, sublane))
        # Cap tb so the live f32 [tb, hid_p] intermediates stay well inside
        # VMEM (avoids Mosaic spilling for large hidden sizes).
        while tb > sublane and 2 * tb * hid_p * 4 > 24 * 1024 * 1024:
            tb //= 2
        tb = max(_round_up(tb, sublane), sublane)
        batch_p = _round_up(batch, tb)
        grid = (pl.cdiv(batch_p, tb),)

        # Explicit VMEM budget: weights once, double-buffered x/out streams,
        # f32 intermediates, plus headroom; clamp to the v7x 64 MiB/TC limit.
        stream_bytes = 2 * tb * in_p * 4 + 2 * tb * out_p * out_itemsize
        interm_bytes = 2 * tb * hid_p * 4
        vmem_limit = int(1.5 * (weight_bytes + stream_bytes + interm_bytes)) + (4 << 20)
        vmem_limit = max(16 << 20, min(vmem_limit, 64 << 20))

        call = pl.pallas_call(
            kernel,
            out_shape=jax.ShapeDtypeStruct((batch_p, out_p), out_dtype),
            grid=grid,
            in_specs=[
                pl.BlockSpec((tb, in_p), lambda i: (i, 0)),   # x: tiled batch
                resident((in_p, hid_p)),                      # w1 (VMEM-resident)
                resident((1, hid_p)),                         # b1
                resident((hid_p, hid_p)),                     # w2
                resident((1, hid_p)),                         # b2
                resident((hid_p, out_p)),                     # w3
                resident((1, out_p)),                         # b3
            ],
            out_specs=pl.BlockSpec((tb, out_p), lambda i: (i, 0)),
            compiler_params=pltpu.CompilerParams(
                # Batch axis shardable across TCs on v7x megacore (harmless on
                # single-TC v5e/v6e). Only pays off when grid has >= 2 steps.
                dimension_semantics=("parallel",),
                vmem_limit_bytes=vmem_limit,
                # Let the pad of x fuse into the pallas_call under jit.
                allow_input_fusion=[True, False, False, False, False, False, False],
            ),
        )
        return call, batch_p

    @jax.jit
    def forward(x):
        batch = x.shape[0]
        call, batch_p = build_call(batch)
        xp = _pad2d(x, batch_p, in_p)          # pad only; cast happens in-kernel
        out = call(xp, w1p, b1p, w2p, b2p, w3p, b3p)
        return out[:batch, :output_size]       # slice fuses under jit

    return forward


def init_policy_mlp_params(key, input_size, hidden_size, output_size):
    """Deterministic init mimicking torch.nn.Linear default (U[-1/sqrt(fan_in), ...])."""
    ks = jax.random.split(key, 6)

    def linear(kw, kb, fan_in, fan_out):
        bound = 1.0 / jnp.sqrt(jnp.float32(fan_in))
        w = jax.random.uniform(kw, (fan_in, fan_out), jnp.float32, -bound, bound)
        b = jax.random.uniform(kb, (1, fan_out), jnp.float32, -bound, bound)
        return w, b

    w1, b1 = linear(ks[0], ks[1], input_size, hidden_size)
    w2, b2 = linear(ks[2], ks[3], hidden_size, hidden_size)
    w3, b3 = linear(ks[4], ks[5], hidden_size, output_size)
    return (w1, b1, w2, b2, w3, b3)


def policy_mlp_reference(x, params, *, softmax: bool):
    """Pure-JAX f32 reference for correctness checking."""
    w1, b1, w2, b2, w3, b3 = params
    h = jnp.maximum(x @ w1 + b1, 0.0)
    h = jnp.maximum(h @ w2 + b2, 0.0)
    out = h @ w3 + b3
    if softmax:
        out = jax.nn.softmax(out, axis=-1)
    return out


# TODO(synk): PolicyMLP.sample (Categorical sampling + one_hot) and
# density_value (references an undefined `Gaussian`) are not part of forward()
# and are not implemented as kernels.

if __name__ == "__main__":
    input_size, hidden_size, output_size = 16, 32, 8
    batch = 64          # tiled into 16-row blocks -> grid=(4,)
    block_batch = 16

    key = jax.random.PRNGKey(0)
    kx, kp = jax.random.split(key)
    x = jax.random.normal(kx, (batch, input_size), jnp.float32)
    params = init_policy_mlp_params(kp, input_size, hidden_size, output_size)

    ref_sm = policy_mlp_reference(x, params, softmax=True)
    ref_logits = policy_mlp_reference(x, params, softmax=False)

    # bf16-matmul path (default for perf).
    fwd_bf16 = make_policy_mlp(params, softmax=True,
                               compute_dtype=jnp.bfloat16,
                               block_batch=block_batch)
    out_bf16 = jax.block_until_ready(fwd_bf16(x))
    assert out_bf16.shape == (batch, output_size)
    assert jnp.allclose(out_bf16, ref_sm, atol=2e-2, rtol=2e-2), \
        "bf16 path mismatch vs f32 reference"
    assert jnp.allclose(jnp.sum(out_bf16, axis=-1), 1.0, atol=1e-3), \
        "softmax rows do not sum to 1"

    # f32-matmul path (tight tolerance sanity check of the fused kernel).
    fwd_f32 = make_policy_mlp(params, softmax=True,
                              compute_dtype=jnp.float32,
                              block_batch=block_batch)
    out_f32 = jax.block_until_ready(fwd_f32(x))
    assert jnp.allclose(out_f32, ref_sm, atol=1e-4, rtol=1e-4), \
        "f32 path mismatch vs reference"
    assert jnp.allclose(jnp.sum(out_f32, axis=-1), 1.0, atol=1e-5), \
        "f32 softmax rows do not sum to 1"

    # Logits path (softmax disabled).
    fwd_logits = make_policy_mlp(params, softmax=False,
                                 compute_dtype=jnp.float32,
                                 block_batch=block_batch)
    out_logits = jax.block_until_ready(fwd_logits(x))
    assert jnp.allclose(out_logits, ref_logits, atol=1e-4, rtol=1e-4), \
        "logits path mismatch vs reference"

    print("KERNEL_OK")
</pallas_src>

<mosaic_0001>
module attributes {stable_mosaic.version = 11 : i64} {
  func.func @_policy_mlp_kernel(%arg0: i32, %arg1: memref<16x128xf32, #tpu.memory_space<vmem>>, %arg2: memref<128x128xbf16, #tpu.memory_space<vmem>>, %arg3: memref<1x128xf32, #tpu.memory_space<vmem>>, %arg4: memref<128x128xbf16, #tpu.memory_space<vmem>>, %arg5: memref<1x128xf32, #tpu.memory_space<vmem>>, %arg6: memref<128x128xbf16, #tpu.memory_space<vmem>>, %arg7: memref<1x128xf32, #tpu.memory_space<vmem>>, %arg8: memref<16x128xf32, #tpu.memory_space<vmem>>) attributes {dimension_semantics = [#tpu.dimension_semantics<parallel>], iteration_bounds = array<i64: 4>, scalar_prefetch = 0 : i64, scratch_operands = 0 : i64, tpu.core_type = #tpu.core_type<tc>, window_params = [{transform_indices = @transform_0, window_bounds = array<i64: 16, 128>}, {pipeline_mode = #tpu.pipeline_mode<synchronous>, transform_indices = @transform_1, window_bounds = array<i64: 128, 128>}, {pipeline_mode = #tpu.pipeline_mode<synchronous>, transform_indices = @transform_2, window_bounds = array<i64: 1, 128>}, {pipeline_mode = #tpu.pipeline_mode<synchronous>, transform_indices = @transform_3, window_bounds = array<i64: 128, 128>}, {pipeline_mode = #tpu.pipeline_mode<synchronous>, transform_indices = @transform_4, window_bounds = array<i64: 1, 128>}, {pipeline_mode = #tpu.pipeline_mode<synchronous>, transform_indices = @transform_5, window_bounds = array<i64: 128, 128>}, {pipeline_mode = #tpu.pipeline_mode<synchronous>, transform_indices = @transform_6, window_bounds = array<i64: 1, 128>}, {transform_indices = @transform_7, window_bounds = array<i64: 16, 128>}]} {
    %c0 = arith.constant 0 : index
    %c0_0 = arith.constant 0 : index
    %0 = vector.load %arg1[%c0, %c0_0] : memref<16x128xf32, #tpu.memory_space<vmem>>, vector<16x128xf32>
    %1 = arith.truncf %0 : vector<16x128xf32> to vector<16x128xbf16>
    %c0_1 = arith.constant 0 : index
    %c0_2 = arith.constant 0 : index
    %2 = vector.load %arg2[%c0_1, %c0_2] : memref<128x128xbf16, #tpu.memory_space<vmem>>, vector<128x128xbf16>
    %cst = arith.constant dense<0.000000e+00> : vector<16x128xf32>
    %3 = tpu.matmul %1, %2, %cst {dimension_numbers = #tpu.dot_dimension_numbers<[1], [0], [0], [1], [0, 0, 1, 1], [], []>} : vector<16x128xbf16>, vector<128x128xbf16>, vector<16x128xf32> -> vector<16x128xf32>
    %c0_3 = arith.constant 0 : index
    %c0_4 = arith.constant 0 : index
    %4 = vector.load %arg3[%c0_3, %c0_4] : memref<1x128xf32, #tpu.memory_space<vmem>>, vector<1x128xf32>
    %5 = vector.broadcast %4 : vector<1x128xf32> to vector<16x128xf32>
    %6 = arith.addf %3, %5 : vector<16x128xf32>
    %cst_5 = arith.constant 0.000000e+00 : f32
    %7 = vector.broadcast %cst_5 : f32 to vector<16x128xf32>
    %8 = arith.maximumf %6, %7 : vector<16x128xf32>
    %9 = arith.truncf %8 : vector<16x128xf32> to vector<16x128xbf16>
    %c0_6 = arith.constant 0 : index
    %c0_7 = arith.constant 0 : index
    %10 = vector.load %arg4[%c0_6, %c0_7] : memref<128x128xbf16, #tpu.memory_space<vmem>>, vector<128x128xbf16>
    %cst_8 = arith.constant dense<0.000000e+00> : vector<16x128xf32>
    %11 = tpu.matmul %9, %10, %cst_8 {dimension_numbers = #tpu.dot_dimension_numbers<[1], [0], [0], [1], [0, 0, 1, 1], [], []>} : vector<16x128xbf16>, vector<128x128xbf16>, vector<16x128xf32> -> vector<16x128xf32>
    %c0_9 = arith.constant 0 : index
    %c0_10 = arith.constant 0 : index
    %12 = vector.load %arg5[%c0_9, %c0_10] : memref<1x128xf32, #tpu.memory_space<vmem>>, vector<1x128xf32>
    %13 = vector.broadcast %12 : vector<1x128xf32> to vector<16x128xf32>
    %14 = arith.addf %11, %13 : vector<16x128xf32>
    %cst_11 = arith.constant 0.000000e+00 : f32
    %15 = vector.broadcast %cst_11 : f32 to vector<16x128xf32>
    %16 = arith.maximumf %14, %15 : vector<16x128xf32>
    %17 = arith.truncf %16 : vector<16x128xf32> to vector<16x128xbf16>
    %c0_12 = arith.constant 0 : index
    %c0_13 = arith.constant 0 : index
    %18 = vector.load %arg6[%c0_12, %c0_13] : memref<128x128xbf16, #tpu.memory_space<vmem>>, vector<128x128xbf16>
    %cst_14 = arith.constant dense<0.000000e+00> : vector<16x128xf32>
    %19 = tpu.matmul %17, %18, %cst_14 {dimension_numbers = #tpu.dot_dimension_numbers<[1], [0], [0], [1], [0, 0, 1, 1], [], []>} : vector<16x128xbf16>, vector<128x128xbf16>, vector<16x128xf32> -> vector<16x128xf32>
    %c0_15 = arith.constant 0 : index
    %c0_16 = arith.constant 0 : index
    %20 = vector.load %arg7[%c0_15, %c0_16] : memref<1x128xf32, #tpu.memory_space<vmem>>, vector<1x128xf32>
    %21 = vector.broadcast %20 : vector<1x128xf32> to vector<16x128xf32>
    %22 = arith.addf %19, %21 : vector<16x128xf32>
    %23 = tpu.iota {dimensions = array<i32: 1>} : vector<16x128xi32>
    %c8_i32 = arith.constant 8 : i32
    %24 = vector.broadcast %c8_i32 : i32 to vector<16x128xi32>
    %25 = arith.cmpi slt, %23, %24 : vector<16x128xi32>
    %cst_17 = arith.constant -1.000000e+30 : f32
    %26 = vector.broadcast %cst_17 : f32 to vector<16x128xf32>
    %27 = arith.select %25, %22, %26 : vector<16x128xi1>, vector<16x128xf32>
    %cst_18 = arith.constant dense<0xFF800000> : vector<16xf32>
    %28 = vector.multi_reduction <maximumf>, %27, %cst_18 [1] : vector<16x128xf32> to vector<16xf32>
    %29 = vector.shape_cast %28 : vector<16xf32> to vector<16x1xf32>
    %30 = vector.broadcast %29 : vector<16x1xf32> to vector<16x128xf32>
    %31 = arith.subf %27, %30 : vector<16x128xf32>
    %32 = math.exp %31 : vector<16x128xf32>
    %cst_19 = arith.constant dense<0.000000e+00> : vector<16xf32>
    %33 = vector.multi_reduction <add>, %32, %cst_19 [1] : vector<16x128xf32> to vector<16xf32>
    %34 = vector.shape_cast %33 : vector<16xf32> to vector<16x1xf32>
    %35 = vector.broadcast %34 : vector<16x1xf32> to vector<16x128xf32>
    %36 = arith.divf %32, %35 : vector<16x128xf32>
    %c0_20 = arith.constant 0 : index
    %c0_21 = arith.constant 0 : index
    %37 = vector.load %arg8[%c0_20, %c0_21] : memref<16x128xf32, #tpu.memory_space<vmem>>, vector<16x128xf32>
    tpu.vector_store %arg8[%c0_20, %c0_21], %36 {strides = array<i32>} : memref<16x128xf32, #tpu.memory_space<vmem>>, vector<16x128xf32>,
    return
  }
  func.func @transform_0(%arg0: i32) -> (i32, i32) {
    %c0_i32 = arith.constant 0 : i32
    %c0_i32_0 = arith.constant 0 : i32
    return %arg0, %c0_i32 : i32, i32
  }
  func.func @transform_1(%arg0: i32) -> (i32, i32) {
    %c0_i32 = arith.constant 0 : i32
    %c0_i32_0 = arith.constant 0 : i32
    %c0_i32_1 = arith.constant 0 : i32
    return %c0_i32, %c0_i32_0 : i32, i32
  }
  func.func @transform_2(%arg0: i32) -> (i32, i32) {
    %c0_i32 = arith.constant 0 : i32
    %c0_i32_0 = arith.constant 0 : i32
    %c0_i32_1 = arith.constant 0 : i32
    return %c0_i32, %c0_i32_0 : i32, i32
  }
  func.func @transform_3(%arg0: i32) -> (i32, i32) {
    %c0_i32 = arith.constant 0 : i32
    %c0_i32_0 = arith.constant 0 : i32
    %c0_i32_1 = arith.constant 0 : i32
    return %c0_i32, %c0_i32_0 : i32, i32
  }
  func.func @transform_4(%arg0: i32) -> (i32, i32) {
    %c0_i32 = arith.constant 0 : i32
    %c0_i32_0 = arith.constant 0 : i32
    %c0_i32_1 = arith.constant 0 : i32
    return %c0_i32, %c0_i32_0 : i32, i32
  }
  func.func @transform_5(%arg0: i32) -> (i32, i32) {
    %c0_i32 = arith.constant 0 : i32
    %c0_i32_0 = arith.constant 0 : i32
    %c0_i32_1 = arith.constant 0 : i32
    return %c0_i32, %c0_i32_0 : i32, i32
  }
  func.func @transform_6(%arg0: i32) -> (i32, i32) {
    %c0_i32 = arith.constant 0 : i32
    %c0_i32_0 = arith.constant 0 : i32
    %c0_i32_1 = arith.constant 0 : i32
    return %c0_i32, %c0_i32_0 : i32, i32
  }
  func.func @transform_7(%arg0: i32) -> (i32, i32) {
    %c0_i32 = arith.constant 0 : i32
    %c0_i32_0 = arith.constant 0 : i32
    return %arg0, %c0_i32 : i32, i32
  }
}

</mosaic_0001>

<llo_original>
// kernel: forward.2
$region0: #{forward.2}
  #allocation0 [shape = 'u32[]', space=smem, size = 0x4, offset = 0x4, fixed_abs, tag = 'smem constant byte address 0x4 - core index']
  #allocation1 [shape = 'u32[144,128]{1,0:T(1,128)}', space=vmem, size = 0x12000, scoped, tag = 'internal scratch']
  #allocation2 [shape = 'u32[2048]{0}', space=vmem, size = 0x2000, scoped, tag = 'scoped memory for forward.2']
  #allocation3 [shape = 'u32[2048]{0}', space=vmem, size = 0x2000, scoped, tag = 'scoped memory for forward.2']
  #allocation4 [shape = 'u32[2048]{0}', space=vmem, size = 0x2000, scoped, tag = 'scoped memory for forward.2']
  #allocation5 [shape = 'u32[2048]{0}', space=vmem, size = 0x2000, scoped, tag = 'scoped memory for forward.2']
  #allocation6 [shape = 'u32[2048]{0}', space=vmem, size = 0x2000, scoped, tag = 'scoped memory for forward.2']
  %s0 = inlined_call_operand.hbm [shape: bf16[128,128], index: 0, kind: input, shape index: {}]
  %s1 = inlined_call_operand.vmem [shape: f32[1,128], index: 1, kind: input, shape index: {}]
  %s2 = inlined_call_operand.hbm [shape: bf16[128,128], index: 2, kind: input, shape index: {}]
  %s3 = inlined_call_operand.vmem [shape: f32[1,128], index: 3, kind: input, shape index: {}]
  %s4 = inlined_call_operand.vmem [shape: bf16[128,128], index: 4, kind: input, shape index: {}]
  %s5 = inlined_call_operand.vmem [shape: f32[1,128], index: 5, kind: input, shape index: {}]
  %s6 = inlined_call_operand.vmem [shape: f32[64,16], index: 6, kind: input, shape index: {}]
  %s7 = inlined_call_operand.<no memory space> [shape: f32[], index: 7, kind: input, shape index: {}]
  %s8 = inlined_call_operand.vmem [shape: f32[64,128], index: 8, kind: output, shape index: {}]
  %s9 = sld [smem:[#allocation0]]
  $region69: #{forward.2} parent=0
    _
  %s11 = ssub.s32 1, %s9
  %s12 = scalar_select 0, %s11, %s9
  %v13 = vstv %s7
  $region1: #{forward.2} parent=0
    #allocation7 [shape = 'u8[32768]{0}', space=vmem, size = 0x8000, scoped, tag = 'input window, operand 1, single buffered']
    #allocation8 [shape = 's32[2]{0}', space=sflag, size = 0x8, scoped, tag = 'scoped memory for forward.2']
    #allocation9 [shape = 'u8[32768]{0}', space=vmem, size = 0x8000, scoped, tag = 'input window, operand 3, single buffered']
    #allocation10 [shape = 's32[1]{0}', space=sflag, size = 0x4, scoped, tag = 'scoped memory for forward.2']
    %14 = vsyncpa [#allocation8], 0
    %15 = vsyncpa [#allocation10], 0
    loop: start=0, step=1, limit=6
    $region2: #{forward.2} parent=1 // loop_pre_header
      _
    $region3: #{forward.2} parent=1 // loop_header
      %s17 = sphi 0, %s21
      %p18 = scmp.ge.s32.totalorder %s17, 6
      %s27 = sphi 0, %s29
      %s30 = sphi 0, %s27
      %s31 = sphi 0, %s30
      %s47 = sphi 0, %s31
      %s51 = sphi 0, %s51
      %s53 = sphi 0, %s51
      %s54 = sphi 0, %s53
      %s68 = sphi 0, %s54
      %s72 = sphi 0, %s72
      %s74 = sphi 0, %s72
      %s75 = sphi 0, %s74
      %s89 = sphi 0, %s75
      %s93 = sphi 0, %s93
      %s95 = sphi 0, %s93
      %s96 = sphi 0, %s95
      %s110 = sphi 0, %s96
      %s114 = sphi 0, %s114
      %s116 = sphi 0, %s114
      %s117 = sphi 0, %s116
      %s131 = sphi 0, %s117
      %s135 = sphi 0, %s135
      %s137 = sphi 0, %s135
      %s138 = sphi 0, %s137
      %s152 = sphi 0, %s138
      %s156 = sphi 0, %s156
      %s158 = sphi 0, %s156
      %s159 = sphi 0, %s158
      %s173 = sphi 0, %s159
      %s179 = sphi 0, %s181
      %s182 = sphi 0, %s179
      %s183 = sphi 0, %s182
      %s199 = sphi 0, %s183
    $region4: #{forward.2} parent=1 // loop_header_branch
      %20 = sbr.rel (%p18) target = $region8
    $region5: #{forward.2} parent=1 // loop_body
      %s22 = ssub.s32 %s17, 1
      %s23 = ssub.s32 %s17, 2
      %s24 = sadd.s32 %s17, 1
      %s25 = ssub.s32 %s17, %s24
      %p26 = scmp.eq.s32.totalorder %s25, 0
      %s28 = sadd.s32 %s27, 1
      %s29 = scalar_select %p26, %s27, %s28
      %p32 = pneg %p26
      %p33 = scmp.eq.s32.totalorder %s17, 3
      %p34 = por %p32, %p33
      %p35 = scmp.ne.s32.totalorder %s27, %s30
      %p36 = scmp.eq.s32.totalorder %s17, 0
      %p37 = por %p35, %p36
      %p38 = scmp.ne.s32.totalorder %s27, %s30
      %p39 = scmp.eq.s32.totalorder %s22, 3
      %p40 = por %p38, %p39
      %p41 = scmp.ne.s32.totalorder %s30, %s31
      %p42 = scmp.eq.s32.totalorder %s22, 0
      %p43 = por %p41, %p42
      %p44 = scmp.ne.s32.totalorder %s30, %s31
      %p45 = scmp.eq.s32.totalorder %s23, 3
      %p46 = por %p44, %p45
      %p48 = scmp.ne.s32.totalorder %s31, %s47
      %p49 = scmp.eq.s32.totalorder %s23, 0
      %p50 = por %p48, %p49
      %s52 = sadd.s32 %s51, 1
      %p55 = scmp.eq.s32.totalorder %s17, 3
      %p56 = scmp.ne.s32.totalorder %s51, %s53
      %p57 = scmp.eq.s32.totalorder %s17, 0
      %p58 = por %p56, %p57
      %p59 = scmp.ne.s32.totalorder %s51, %s53
      %p60 = scmp.eq.s32.totalorder %s22, 3
      %p61 = por %p59, %p60
      %p62 = scmp.ne.s32.totalorder %s53, %s54
      %p63 = scmp.eq.s32.totalorder %s22, 0
      %p64 = por %p62, %p63
      %p65 = scmp.ne.s32.totalorder %s53, %s54
      %p66 = scmp.eq.s32.totalorder %s23, 3
      %p67 = por %p65, %p66
      %p69 = scmp.ne.s32.totalorder %s54, %s68
      %p70 = scmp.eq.s32.totalorder %s23, 0
      %p71 = por %p69, %p70
      %s73 = sadd.s32 %s72, 1
      %p76 = scmp.eq.s32.totalorder %s17, 3
      %p77 = scmp.ne.s32.totalorder %s72, %s74
      %p78 = scmp.eq.s32.totalorder %s17, 0
      %p79 = por %p77, %p78
      %p80 = scmp.ne.s32.totalorder %s72, %s74
      %p81 = scmp.eq.s32.totalorder %s22, 3
      %p82 = por %p80, %p81
      %p83 = scmp.ne.s32.totalorder %s74, %s75
      %p84 = scmp.eq.s32.totalorder %s22, 0
      %p85 = por %p83, %p84
      %p86 = scmp.ne.s32.totalorder %s74, %s75
      %p87 = scmp.eq.s32.totalorder %s23, 3
      %p88 = por %p86, %p87
      %p90 = scmp.ne.s32.totalorder %s75, %s89
      %p91 = scmp.eq.s32.totalorder %s23, 0
      %p92 = por %p90, %p91
      %s94 = sadd.s32 %s93, 1
      %p97 = scmp.eq.s32.totalorder %s17, 3
      %p98 = scmp.ne.s32.totalorder %s93, %s95
      %p99 = scmp.eq.s32.totalorder %s17, 0
      %p100 = por %p98, %p99
      %p101 = scmp.ne.s32.totalorder %s93, %s95
      %p102 = scmp.eq.s32.totalorder %s22, 3
      %p103 = por %p101, %p102
      %p104 = scmp.ne.s32.totalorder %s95, %s96
      %p105 = scmp.eq.s32.totalorder %s22, 0
      %p106 = por %p104, %p105
      %p107 = scmp.ne.s32.totalorder %s95, %s96
      %p108 = scmp.eq.s32.totalorder %s23, 3
      %p109 = por %p107, %p108
      %p111 = scmp.ne.s32.totalorder %s96, %s110
      %p112 = scmp.eq.s32.totalorder %s23, 0
      %p113 = por %p111, %p112
      %s115 = sadd.s32 %s114, 1
      %p118 = scmp.eq.s32.totalorder %s17, 3
      %p119 = scmp.ne.s32.totalorder %s114, %s116
      %p120 = scmp.eq.s32.totalorder %s17, 0
      %p121 = por %p119, %p120
      %p122 = scmp.ne.s32.totalorder %s114, %s116
      %p123 = scmp.eq.s32.totalorder %s22, 3
      %p124 = por %p122, %p123
      %p125 = scmp.ne.s32.totalorder %s116, %s117
      %p126 = scmp.eq.s32.totalorder %s22, 0
      %p127 = por %p125, %p126
      %p128 = scmp.ne.s32.totalorder %s116, %s117
      %p129 = scmp.eq.s32.totalorder %s23, 3
      %p130 = por %p128, %p129
      %p132 = scmp.ne.s32.totalorder %s117, %s131
      %p133 = scmp.eq.s32.totalorder %s23, 0
      %p134 = por %p132, %p133
      %s136 = sadd.s32 %s135, 1
      %p139 = scmp.eq.s32.totalorder %s17, 3
      %p140 = scmp.ne.s32.totalorder %s135, %s137
      %p141 = scmp.eq.s32.totalorder %s17, 0
      %p142 = por %p140, %p141
      %p143 = scmp.ne.s32.totalorder %s135, %s137
      %p144 = scmp.eq.s32.totalorder %s22, 3
      %p145 = por %p143, %p144
      %p146 = scmp.ne.s32.totalorder %s137, %s138
      %p147 = scmp.eq.s32.totalorder %s22, 0
      %p148 = por %p146, %p147
      %p149 = scmp.ne.s32.totalorder %s137, %s138
      %p150 = scmp.eq.s32.totalorder %s23, 3
      %p151 = por %p149, %p150
      %p153 = scmp.ne.s32.totalorder %s138, %s152
      %p154 = scmp.eq.s32.totalorder %s23, 0
      %p155 = por %p153, %p154
      %s157 = sadd.s32 %s156, 1
      %p160 = scmp.eq.s32.totalorder %s17, 3
      %p161 = scmp.ne.s32.totalorder %s156, %s158
      %p162 = scmp.eq.s32.totalorder %s17, 0
      %p163 = por %p161, %p162
      %p164 = scmp.ne.s32.totalorder %s156, %s158
      %p165 = scmp.eq.s32.totalorder %s22, 3
      %p166 = por %p164, %p165
      %p167 = scmp.ne.s32.totalorder %s158, %s159
      %p168 = scmp.eq.s32.totalorder %s22, 0
      %p169 = por %p167, %p168
      %p170 = scmp.ne.s32.totalorder %s158, %s159
      %p171 = scmp.eq.s32.totalorder %s23, 3
      %p172 = por %p170, %p171
      %p174 = scmp.ne.s32.totalorder %s159, %s173
      %p175 = scmp.eq.s32.totalorder %s23, 0
      %p176 = por %p174, %p175
      %s177 = ssub.s32 %s17, %s24
      %p178 = scmp.eq.s32.totalorder %s177, 0
      %s180 = sadd.s32 %s179, 1
      %s181 = scalar_select %p178, %s179, %s180
      %p184 = pneg %p178
      %p185 = scmp.eq.s32.totalorder %s17, 3
      %p186 = por %p184, %p185
      %p187 = scmp.ne.s32.totalorder %s179, %s182
      %p188 = scmp.eq.s32.totalorder %s17, 0
      %p189 = por %p187, %p188
      %p190 = scmp.ne.s32.totalorder %s179, %s182
      %p191 = scmp.eq.s32.totalorder %s22, 3
      %p192 = por %p190, %p191
      %p193 = scmp.ne.s32.totalorder %s182, %s183
      %p194 = scmp.eq.s32.totalorder %s22, 0
      %p195 = por %p193, %p194
      %p196 = scmp.ne.s32.totalorder %s182, %s183
      %p197 = scmp.eq.s32.totalorder %s23, 3
      %p198 = por %p196, %p197
      %p200 = scmp.ne.s32.totalorder %s183, %s199
      %p201 = scmp.eq.s32.totalorder %s23, 0
      %p202 = por %p200, %p201
      %p203 = scmp.le.s32.totalorder 1, %s17
      %p204 = scmp.lt.s32.totalorder %s17, 5
      %p205 = pnand %p203, %p204
      %p206 = pneg %p205
      // Predicated region
      $region9: #{forward.2} parent=5 // pred_check
        _
      $region10: #{forward.2} parent=5 // pred_check_branch
        %208 = sbr.rel (%p205) target = $region12
      $region11: #{forward.2} parent=5 // pred_region
        %s209 = ssub.s32 %s17, 1
        // Predicated region
        $region13: #{forward.2} parent=11 // pred_check
          %p210 = pneg %p64
        $region14: #{forward.2} parent=11 // pred_check_branch
          %212 = sbr.rel (%p210) target = $region16
        $region15: #{forward.2} parent=11 // pred_region
          %s214 = ssub.s32 1024, 1024
          %215 = vsyncadd [#allocation8], %s214
          %s216 = sshll.u32 [#allocation7], 4
          %s217 = int_to_ptr.vmem [resolvable:$true] %s216
          %222 = dma.hbm_to_vmem [thread:$0]  %s0, 1024, %s217, [#allocation8], 128, 128, 8
        $region16: #{forward.2} parent=11 // pred_fallthru
          _
        // Predicated region
        $region17: #{forward.2} parent=11 // pred_check
          %p223 = pneg %p85
        $region18: #{forward.2} parent=11 // pred_check_branch
          %225 = sbr.rel (%p223) target = $region20
        $region19: #{forward.2} parent=11 // pred_region
          _
        $region20: #{forward.2} parent=11 // pred_fallthru
          _
        // Predicated region
        $region21: #{forward.2} parent=11 // pred_check
          %p226 = pneg %p106
        $region22: #{forward.2} parent=11 // pred_check_branch
          %228 = sbr.rel (%p226) target = $region24
        $region23: #{forward.2} parent=11 // pred_region
          %s230 = ssub.s32 1024, 1024
          %231 = vsyncadd [#allocation10], %s230
          %s232 = sshll.u32 [#allocation9], 4
          %s233 = int_to_ptr.vmem [resolvable:$true] %s232
          %238 = dma.hbm_to_vmem [thread:$0]  %s2, 1024, %s233, [#allocation10], 128, 128, 8
        $region24: #{forward.2} parent=11 // pred_fallthru
          _
        // Predicated region
        $region25: #{forward.2} parent=11 // pred_check
          %p239 = pneg %p127
        $region26: #{forward.2} parent=11 // pred_check_branch
          %241 = sbr.rel (%p239) target = $region28
        $region27: #{forward.2} parent=11 // pred_region
          _
        $region28: #{forward.2} parent=11 // pred_fallthru
          _
        // Predicated region
        $region29: #{forward.2} parent=11 // pred_check
          %p242 = pneg %p148
        $region30: #{forward.2} parent=11 // pred_check_branch
          %244 = sbr.rel (%p242) target = $region32
        $region31: #{forward.2} parent=11 // pred_region
          _
        $region32: #{forward.2} parent=11 // pred_fallthru
          _
        // Predicated region
        $region33: #{forward.2} parent=11 // pred_check
          %p245 = pneg %p169
        $region34: #{forward.2} parent=11 // pred_check_branch
          %247 = sbr.rel (%p245) target = $region36
        $region35: #{forward.2} parent=11 // pred_region
          _
        $region36: #{forward.2} parent=11 // pred_fallthru
          _
      $region12: #{forward.2} parent=5 // pred_fallthru
        _
      %p248 = scmp.lt.s32.totalorder %s17, 4
      // Predicated region
      $region37: #{forward.2} parent=5 // pred_check
        %p249 = pneg %p248
      $region38: #{forward.2} parent=5 // pred_check_branch
        %251 = sbr.rel (%p249) target = $region40
      $region39: #{forward.2} parent=5 // pred_region
        // Predicated region
        $region41: #{forward.2} parent=39 // pred_check
          %p252 = pneg %p37
        $region42: #{forward.2} parent=39 // pred_check_branch
          %254 = sbr.rel (%p252) target = $region44
        $region43: #{forward.2} parent=39 // pred_region
          %s255 = smul.u32 2, %s17
          %p256 = scmp.lt.s32.totalorder %s255, 7
          %s257 = scalar_select %p256, %s255, 7
          %s258 = smul.addr %s257, 8
          %s259 = scalar_lea.vmem %s6, %s258
          %s260 = smul.u32 2, %s17
        $region44: #{forward.2} parent=39 // pred_fallthru
          _
      $region40: #{forward.2} parent=5 // pred_fallthru
        _
      %p261 = scmp.le.s32.totalorder 1, %s17
      %p262 = scmp.lt.s32.totalorder %s17, 5
      %p263 = pnand %p261, %p262
      %p264 = pneg %p263
      // Predicated region
      $region45: #{forward.2} parent=5 // pred_check
        _
      $region46: #{forward.2} parent=5 // pred_check_branch
        %266 = sbr.rel (%p263) target = $region48
      $region47: #{forward.2} parent=5 // pred_region
        #allocation11 [shape = 'u8[8192]{0}', space=vmem, size = 0x2000, dematerialized = true, scoped, tag = 'FusionAdapter Buffer %fusion.1 = f32[64,128]{1,0:T(8,128)} fusion(%param_6.1, %param_7), kind=kLoop, calls=%fused_computation.1.clone, metadata={op_name="jit(forward)/jit(_pad)/pad" stack_frame_id=2}']
        %s267 = ssub.s32 %s17, 1
        // Predicated region
        $region49: #{forward.2} parent=47 // pred_check
          %p268 = pneg %p64
        $region50: #{forward.2} parent=47 // pred_check_branch
          %270 = sbr.rel (%p268) target = $region52
        $region51: #{forward.2} parent=47 // pred_region
          %271 = dma.done [#allocation8], 1024
        $region52: #{forward.2} parent=47 // pred_fallthru
          _
        // Predicated region
        $region53: #{forward.2} parent=47 // pred_check
          %p272 = pneg %p106
        $region54: #{forward.2} parent=47 // pred_check_branch
          %274 = sbr.rel (%p272) target = $region56
        $region55: #{forward.2} parent=47 // pred_region
          %275 = dma.done [#allocation10], 1024
        $region56: #{forward.2} parent=47 // pred_fallthru
          _
        %s276 = smul.u32 2, %s22
        %p277 = scmp.lt.s32.totalorder %s276, 7
        %s278 = scalar_select %p277, %s276, 7
        %s279 = smul.addr %s278, 8
        %s280 = scalar_lea.vmem %s6, %s279
        %p281 = pneg %p43
        %p282 = pneg %p40
        %p283 = pneg %p64
        %p284 = pneg %p61
        %p285 = pneg %p85
        %p286 = pneg %p82
        %p287 = pneg %p106
        %p288 = pneg %p103
        %p289 = pneg %p127
        %p290 = pneg %p124
        %p291 = pneg %p148
        %p292 = pneg %p145
        %p293 = pneg %p169
        %p294 = pneg %p166
        %p295 = pneg %p195
        %p296 = pneg %p192
        %s297 = smul.u32 2, %s22
        %p298 = scmp.lt.s32.totalorder %s297, 7
        %s299 = scalar_select %p298, %s297, 7
        %s300 = smul.addr %s299, 8
        %s301 = scalar_lea.vmem %s8, %s300
        %s302 = smul.u32 2, %s22
        %p303 = scmp.lt.s32.totalorder %s302, 7
        %s304 = scalar_select %p303, %s302, 7
        %s305 = smul.addr %s304, 8
        %s306 = scalar_lea.vmem %s6, %s305
        %s307 = smul.u32 2, %s22
        %s308 = smul.u32 2, %s22
        %p309 = scmp.lt.s32.totalorder %s308, 7
        %s310 = scalar_select %p309, %s308, 7
        %s311 = smul.addr %s310, 8
        %s312 = scalar_lea.vmem %s8, %s311
        %s313 = smul.u32 2, %s22
        %v314 = vld [vmem:[%s306] sm:$0xff]
        %v315 = vlaneseq
        %v316 = vand.u32 %v315, 127
        %vm318 = vcmp.lt.s32.totalorder %v316, 16
        %v319 = vsel %vm318, %v314, %v13
        %321 = vst [vmem:[#allocation11] sm:$0xff] %v319
        %s322 = scalar_lea.vmem %s306, 8
        %v323 = vld [vmem:[%s322] sm:$0xff]
        %v324 = vlaneseq
        %v325 = vand.u32 %v324, 127
        %vm327 = vcmp.lt.s32.totalorder %v325, 16
        %v328 = vsel %vm327, %v323, %v13
        %s329 = scalar_lea.vmem [#allocation11], 8
        %331 = vst [vmem:[%s329] sm:$0xff] %v328
        %v333 = vld [vmem:[#allocation11] sm:$0xff]
        %v334 = vld [vmem:[#allocation11 + $0x8] sm:$0xff]
        %v335 = vpack.c.bf16 %v334, %v333
        %v336 = vld [vmem:[#allocation7] sm:$0xff]
        %v337 = vld [vmem:[#allocation7 + $0x8] sm:$0xff]
        %v338 = vld [vmem:[#allocation7 + $0x10] sm:$0xff]
        %v339 = vld [vmem:[#allocation7 + $0x18] sm:$0xff]
        %v340 = vld [vmem:[#allocation7 + $0x20] sm:$0xff]
        %v341 = vld [vmem:[#allocation7 + $0x28] sm:$0xff]
        %v342 = vld [vmem:[#allocation7 + $0x30] sm:$0xff]
        %v343 = vld [vmem:[#allocation7 + $0x38] sm:$0xff]
        %v344 = vld [vmem:[%s1] sm:$0x1]
        %v346 = vlaneseq
        %v347 = vshrl.u32 %v346, 7
        %v348 = vsub.s32 0, %v347
        %v349 = vrot.slane %v344, %v348
        %351 = vmatprep.subr.bf16.mxu0 0
        %352 = vmatpush1.bf16.msra.mxu0 %v336
        %353 = vmatprep.subr.bf16.mxu0 0
        %354 = vmatpush1.bf16.msra.mxu0 %v337
        %355 = vmatprep.subr.bf16.mxu0 0
        %356 = vmatpush1.bf16.msra.mxu0 %v338
        %357 = vmatprep.subr.bf16.mxu0 0
        %358 = vmatpush1.bf16.msra.mxu0 %v339
        %359 = vmatprep.subr.bf16.mxu0 0
        %360 = vmatpush1.bf16.msra.mxu0 %v340
        %361 = vmatprep.subr.bf16.mxu0 0
        %362 = vmatpush1.bf16.msra.mxu0 %v341
        %363 = vmatprep.subr.bf16.mxu0 0
        %364 = vmatpush1.bf16.msra.mxu0 %v342
        %365 = vmatprep.subr.bf16.mxu0 0
        %366 = vmatpush1.bf16.msra.mxu0 %v343
        %367 = vmatprep.subr.bf16.mxu0 0
        %368 = vmatpush1.bf16.msra.mxu0 0
        %369 = vmatprep.subr.bf16.mxu0 0
        %370 = vmatpush1.bf16.msra.mxu0 0
        %371 = vmatprep.subr.bf16.mxu0 0
        %372 = vmatpush1.bf16.msra.mxu0 0
        %373 = vmatprep.subr.bf16.mxu0 0
        %374 = vmatpush1.bf16.msra.mxu0 0
        %375 = vmatprep.subr.bf16.mxu0 0
        %376 = vmatpush1.bf16.msra.mxu0 0
        %377 = vmatprep.subr.bf16.mxu0 0
        %378 = vmatpush1.bf16.msra.mxu0 0
        %379 = vmatprep.subr.bf16.mxu0 0
        %380 = vmatpush1.bf16.msra.mxu0 0
        %381 = vmatprep.subr.bf16.mxu0 0
        %382 = vmatpush1.bf16.msra.mxu0 0
        %383 = vmatprep.mubr.bf16.mxu0 0
        %384 = vmatmul.mubr.bf16.gmra.mrb[0].mxu0 %v335
        %v385 = vpop.f32.mrb[0].mxu0
        %v386 = vadd.f32 %v349, %v385
        %v387 = vpop.f32.mrb[0].mxu0
        %v388 = vpop.f32.mrb[0].mxu0
        %v389 = vadd.f32 %v349, %v388
        %v390 = vpop.f32.mrb[0].mxu0
        %391 = vdwg.mxu0
        %v392 = vmax.f32 %v386, 0.0
        %v393 = vmax.f32 %v389, 0.0
        %v394 = vpack.c.bf16 %v393, %v392
        %v395 = vld [vmem:[#allocation9] sm:$0xff]
        %v396 = vld [vmem:[#allocation9 + $0x8] sm:$0xff]
        %v397 = vld [vmem:[#allocation9 + $0x10] sm:$0xff]
        %v398 = vld [vmem:[#allocation9 + $0x18] sm:$0xff]
        %v399 = vld [vmem:[#allocation9 + $0x20] sm:$0xff]
        %v400 = vld [vmem:[#allocation9 + $0x28] sm:$0xff]
        %v401 = vld [vmem:[#allocation9 + $0x30] sm:$0xff]
        %v402 = vld [vmem:[#allocation9 + $0x38] sm:$0xff]
        %v403 = vld [vmem:[%s3] sm:$0x1]
        %v405 = vlaneseq
        %v406 = vshrl.u32 %v405, 7
        %v407 = vsub.s32 0, %v406
        %v408 = vrot.slane %v403, %v407
        %410 = vmatprep.subr.bf16.mxu0 0
        %411 = vmatpush1.bf16.msra.mxu0 %v395
        %412 = vmatprep.subr.bf16.mxu0 0
        %413 = vmatpush1.bf16.msra.mxu0 %v396
        %414 = vmatprep.subr.bf16.mxu0 0
        %415 = vmatpush1.bf16.msra.mxu0 %v397
        %416 = vmatprep.subr.bf16.mxu0 0
        %417 = vmatpush1.bf16.msra.mxu0 %v398
        %418 = vmatprep.subr.bf16.mxu0 0
        %419 = vmatpush1.bf16.msra.mxu0 %v399
        %420 = vmatprep.subr.bf16.mxu0 0
        %421 = vmatpush1.bf16.msra.mxu0 %v400
        %422 = vmatprep.subr.bf16.mxu0 0
        %423 = vmatpush1.bf16.msra.mxu0 %v401
        %424 = vmatprep.subr.bf16.mxu0 0
        %425 = vmatpush1.bf16.msra.mxu0 %v402
        %426 = vmatprep.subr.bf16.mxu0 0
        %427 = vmatpush1.bf16.msra.mxu0 0
        %428 = vmatprep.subr.bf16.mxu0 0
        %429 = vmatpush1.bf16.msra.mxu0 0
        %430 = vmatprep.subr.bf16.mxu0 0
        %431 = vmatpush1.bf16.msra.mxu0 0
        %432 = vmatprep.subr.bf16.mxu0 0
        %433 = vmatpush1.bf16.msra.mxu0 0
        %434 = vmatprep.subr.bf16.mxu0 0
        %435 = vmatpush1.bf16.msra.mxu0 0
        %436 = vmatprep.subr.bf16.mxu0 0
        %437 = vmatpush1.bf16.msra.mxu0 0
        %438 = vmatprep.subr.bf16.mxu0 0
        %439 = vmatpush1.bf16.msra.mxu0 0
        %440 = vmatprep.subr.bf16.mxu0 0
        %441 = vmatpush1.bf16.msra.mxu0 0
        %442 = vmatprep.mubr.bf16.mxu0 0
        %443 = vmatmul.mubr.bf16.gmra.mrb[0].mxu0 %v394
        %v444 = vpop.f32.mrb[0].mxu0
        %v445 = vadd.f32 %v408, %v444
        %v446 = vpop.f32.mrb[0].mxu0
        %v447 = vpop.f32.mrb[0].mxu0
        %v448 = vadd.f32 %v408, %v447
        %v449 = vpop.f32.mrb[0].mxu0
        %450 = vdwg.mxu0
        %v451 = vmax.f32 %v445, 0.0
        %v452 = vmax.f32 %v448, 0.0
        %v453 = vpack.c.bf16 %v452, %v451
        %v454 = vld [vmem:[%s4] sm:$0xff]
        %v455 = vld [vmem:[%s4 + $0x8] sm:$0xff]
        %v456 = vld [vmem:[%s4 + $0x10] sm:$0xff]
        %v457 = vld [vmem:[%s4 + $0x18] sm:$0xff]
        %v458 = vld [vmem:[%s4 + $0x20] sm:$0xff]
        %v459 = vld [vmem:[%s4 + $0x28] sm:$0xff]
        %v460 = vld [vmem:[%s4 + $0x30] sm:$0xff]
        %v461 = vld [vmem:[%s4 + $0x38] sm:$0xff]
        %v462 = vld [vmem:[%s5] sm:$0x1]
        %v464 = vlaneseq
        %v465 = vshrl.u32 %v464, 7
        %v466 = vsub.s32 0, %v465
        %v467 = vrot.slane %v462, %v466
        %469 = vmatprep.subr.bf16.mxu0 0
        %470 = vmatpush1.bf16.msra.mxu0 %v454
        %471 = vmatprep.subr.bf16.mxu0 0
        %472 = vmatpush1.bf16.msra.mxu0 %v455
        %473 = vmatprep.subr.bf16.mxu0 0
        %474 = vmatpush1.bf16.msra.mxu0 %v456
        %475 = vmatprep.subr.bf16.mxu0 0
        %476 = vmatpush1.bf16.msra.mxu0 %v457
        %477 = vmatprep.subr.bf16.mxu0 0
        %478 = vmatpush1.bf16.msra.mxu0 %v458
        %479 = vmatprep.subr.bf16.mxu0 0
        %480 = vmatpush1.bf16.msra.mxu0 %v459
        %481 = vmatprep.subr.bf16.mxu0 0
        %482 = vmatpush1.bf16.msra.mxu0 %v460
        %483 = vmatprep.subr.bf16.mxu0 0
        %484 = vmatpush1.bf16.msra.mxu0 %v461
        %485 = vmatprep.subr.bf16.mxu0 0
        %486 = vmatpush1.bf16.msra.mxu0 0
        %487 = vmatprep.subr.bf16.mxu0 0
        %488 = vmatpush1.bf16.msra.mxu0 0
        %489 = vmatprep.subr.bf16.mxu0 0
        %490 = vmatpush1.bf16.msra.mxu0 0
        %491 = vmatprep.subr.bf16.mxu0 0
        %492 = vmatpush1.bf16.msra.mxu0 0
        %493 = vmatprep.subr.bf16.mxu0 0
        %494 = vmatpush1.bf16.msra.mxu0 0
        %495 = vmatprep.subr.bf16.mxu0 0
        %496 = vmatpush1.bf16.msra.mxu0 0
        %497 = vmatprep.subr.bf16.mxu0 0
        %498 = vmatpush1.bf16.msra.mxu0 0
        %499 = vmatprep.subr.bf16.mxu0 0
        %500 = vmatpush1.bf16.msra.mxu0 0
        %501 = vmatprep.mubr.bf16.mxu0 0
        %502 = vmatmul.mubr.bf16.gmra.mrb[0].mxu0 %v453
        %v503 = vpop.f32.mrb[0].mxu0
        %v504 = vadd.f32 %v467, %v503
        %v505 = vpop.f32.mrb[0].mxu0
        %v506 = vpop.f32.mrb[0].mxu0
        %v507 = vadd.f32 %v467, %v506
        %v508 = vpop.f32.mrb[0].mxu0
        %509 = vdwg.mxu0
        %v510 = vlaneseq
        %v511 = vand.u32 %v510, 127
        %vm512 = vcmp.lt.s32.totalorder %v511, 8
        %v513 = vsel %vm512, %v504, -1e+30
        %v514 = vsel %vm512, %v507, -1e+30
        %515 = vmax.xlane.f32.xlu0 %v513
        %v516 = vpop.xlane.xlu0 %515
        %517 = vmax.xlane.f32.xlu0 %v514
        %v518 = vpop.xlane.xlu0 %517
        %v519 = vsub.f32 %v513, %v516
        %v520 = vsub.f32 %v514, %v518
        %v521 = vmul.f32 %v519, 1.442695
        %v522 = vpow.pop %v521
        %v523 = vmul.f32 %v520, 1.442695
        %v524 = vpow.pop %v523
        %525 = vadd.xlane.f32.xlu0 %v522
        %v526 = vpop.xlane.xlu0 %525
        %527 = vadd.xlane.f32.xlu0 %v524
        %v528 = vpop.xlane.xlu0 %527
        %v529 = vrcp.pop %v526
        %v530 = vmul.f32 %v522, %v529
        %v531 = vrcp.pop %v528
        %v532 = vmul.f32 %v524, %v531
        %533 = vst [vmem:[%s312] sm:$0xff] %v530
        %534 = vst [vmem:[%s312 + $0x8] sm:$0xff] %v532
        %s535 = smul.u32 2, %s22
        %p536 = scmp.lt.s32.totalorder %s535, 7
        %s537 = scalar_select %p536, %s535, 7
        %s538 = smul.addr %s537, 8
        %s539 = scalar_lea.vmem %s8, %s538
        // Predicated region
        $region57: #{forward.2} parent=47 // pred_check
          %p540 = pneg %p192
        $region58: #{forward.2} parent=47 // pred_check_branch
          %542 = sbr.rel (%p540) target = $region60
        $region59: #{forward.2} parent=47 // pred_region
          %s543 = smul.u32 2, %s22
        $region60: #{forward.2} parent=47 // pred_fallthru
          _
      $region48: #{forward.2} parent=5 // pred_fallthru
        _
      %p544 = scmp.le.s32.totalorder 2, %s17
      // Predicated region
      $region61: #{forward.2} parent=5 // pred_check
        %p545 = pneg %p544
      $region62: #{forward.2} parent=5 // pred_check_branch
        %547 = sbr.rel (%p545) target = $region64
      $region63: #{forward.2} parent=5 // pred_region
        %s548 = ssub.s32 %s17, 2
        // Predicated region
        $region65: #{forward.2} parent=63 // pred_check
          %p549 = pneg %p198
        $region66: #{forward.2} parent=63 // pred_check_branch
          %551 = sbr.rel (%p549) target = $region68
        $region67: #{forward.2} parent=63 // pred_region
          %s552 = smul.u32 2, %s23
          %p553 = scmp.lt.s32.totalorder %s552, 7
          %s554 = scalar_select %p553, %s552, 7
          %s555 = smul.addr %s554, 8
          %s556 = scalar_lea.vmem %s8, %s555
        $region68: #{forward.2} parent=63 // pred_fallthru
          _
      $region64: #{forward.2} parent=5 // pred_fallthru
        _
    $region6: #{forward.2} parent=1 // loop_footer
      %s21 = sadd.s32 1, %s17
    $region7: #{forward.2} parent=1 // loop_footer_branch
      %16 = sbr.rel target = $region3
    $region8: #{forward.2} parent=1 // loop_exit
      _
    %557 = vsyncpa [#allocation8], 1
    %s558 = scalar_lea.sflag [#allocation8], 1
    %559 = vsyncpa %s558, 1
    %560 = vsyncpa [#allocation10], 1

</llo_original>
